<compile_context>
chip_gen: v5e
topology: v5e:2x2
jax: 0.10.0
libtpu: 0.0.40
codegen_flags: <defaults>
</compile_context>

<pallas_src>
import functools

import jax
import jax.numpy as jnp
from jax import lax
from jax.experimental import pallas as pl
from jax.experimental.pallas import tpu as pltpu

MODALITIES = ("rgb", "flow", "depth", "skeleton", "face", "left_hand", "right_hand")


# ------------------------------------------------------------------
# Fused Pallas kernel: 7 backbones (block-diagonal) + neck + head
# ------------------------------------------------------------------
def _fused_forward_kernel(x_ref, wbd_ref, wn_ref, bn_ref, wh_ref, bh_ref,
                          o_ref, feat_ref, *, inv_hw, feat_mask):
    """x_ref   : (B, HW, K)  bf16, K = 7*C + 1 (trailing ones channel = bias carrier)
       wbd_ref : (K, 7F)     bf16 block-diagonal backbone weight (+ bias row)
       wn_ref  : (7F, FUSE)  f32 neck weight        bn_ref : (1, FUSE) f32
       wh_ref  : (FUSE, CP)  f32 padded head weight bh_ref : (1, CP)   f32
       o_ref   : (B, CP)     f32 logits (CP = num_classes padded to 128 lanes)
       feat_ref: (B, 7F)     f32 VMEM scratch for the pooled per-sample features."""
    batch = x_ref.shape[0]

    feat_ref[...] = jnp.zeros_like(feat_ref)

    def backbone_step(bi, carry):
        x = x_ref[bi]                                                    # (HW, K) bf16
        # all seven "1x1 convs" in one block-diagonal channel-mixing matmul (f32 acc)
        y = jnp.dot(x, wbd_ref[...], preferred_element_type=jnp.float32)  # (HW, 7F)
        y = jnp.maximum(y, 0.0)                                          # ReLU
        row = jnp.sum(y, axis=0, keepdims=True) * inv_hw                 # GAP -> (1, 7F)
        # merge row `bi` into the (B, 7F) feature matrix without a dynamic-sublane store
        sel = lax.broadcasted_iota(jnp.int32, (batch, 1), 0) == bi
        feat_ref[...] = jnp.where(sel, row, feat_ref[...])
        return carry

    lax.fori_loop(0, batch, backbone_step, 0)

    feat = feat_ref[...]                                                 # (B, 7F) f32
    if feat_mask is not None:
        # missing modalities must contribute an exactly-zero feature vector
        feat = feat * jnp.asarray(feat_mask, jnp.float32).reshape(1, -1)

    # neck: batched Linear(7F -> FUSE) + ReLU on the MXU
    neck = jnp.dot(feat, wn_ref[...], preferred_element_type=jnp.float32) + bn_ref[...]
    neck = jnp.maximum(neck, 0.0)                                        # (B, FUSE)
    # head: batched Linear(FUSE -> CP); single lane-dense (B, CP) store
    o_ref[...] = (jnp.dot(neck, wh_ref[...], preferred_element_type=jnp.float32)
                  + bh_ref[...])


# ------------------------------------------------------------------
# One-time parameter packing (block-diag backbone weight, padded head)
# ------------------------------------------------------------------
def pack_params(params):
    C, F = params["backbones"][MODALITIES[0]]["w"].shape
    n = len(MODALITIES)
    k_full = n * C + 1                                     # + ones channel for biases
    wbd = jnp.zeros((k_full, n * F), jnp.float32)
    for i, m in enumerate(MODALITIES):
        p = params["backbones"][m]
        wbd = wbd.at[i * C:(i + 1) * C, i * F:(i + 1) * F].set(p["w"])
        wbd = wbd.at[k_full - 1, i * F:(i + 1) * F].set(p["b"])
    wn = params["neck"]["w"].astype(jnp.float32)                        # (7F, FUSE)
    bn = params["neck"]["b"].reshape(1, -1).astype(jnp.float32)         # (1, FUSE)
    wh = params["head"]["w"].astype(jnp.float32)                        # (FUSE, CLS)
    bh = params["head"]["b"].astype(jnp.float32)
    fuse, num_classes = wh.shape
    cls_pad = 128 * pl.cdiv(num_classes, 128)
    wh_p = jnp.zeros((fuse, cls_pad), jnp.float32).at[:, :num_classes].set(wh)
    bh_p = jnp.zeros((1, cls_pad), jnp.float32).at[0, :num_classes].set(bh)
    return {"wbd": wbd.astype(jnp.bfloat16), "wn": wn, "bn": bn, "wh": wh_p, "bh": bh_p,
            "in_channels": C, "feat_dim": F, "fuse_dim": fuse,
            "num_classes": num_classes, "cls_pad": cls_pad}


# ------------------------------------------------------------------
# Per-call wrapper: activation packing + single pallas_call
# ------------------------------------------------------------------
def multimodal_forward(packed, *, rgb=None, flow=None, depth=None, skeleton=None,
                       face=None, right_hand=None, left_hand=None):
    """Mirrors MultiModalModel.forward: backbones on the provided inputs, neck over the
    concatenated features (missing modality -> zero feature), head -> cls_score."""
    inputs = {"rgb": rgb, "flow": flow, "depth": depth, "skeleton": skeleton,
              "face": face, "left_hand": left_hand, "right_hand": right_hand}
    present = tuple(inputs[m] is not None for m in MODALITIES)
    if not any(present):
        raise ValueError("at least one modality input must be provided")

    C = packed["in_channels"]
    F = packed["feat_dim"]
    x0 = next(inputs[m] for m in MODALITIES if inputs[m] is not None)
    B, _, H, W = x0.shape
    hw = H * W

    # activations -> lane-dense bf16 (B, HW, C) slabs concatenated along channels,
    # plus a trailing ones channel that carries the folded conv biases.
    slabs = []
    for m in MODALITIES:
        x = inputs[m]
        if x is None:
            slabs.append(jnp.zeros((B, hw, C), jnp.bfloat16))
        else:
            if x.shape != (B, C, H, W):
                raise ValueError(f"modality {m}: expected {(B, C, H, W)}, got {x.shape}")
            slabs.append(jnp.transpose(x.reshape(B, C, hw), (0, 2, 1)).astype(jnp.bfloat16))
    slabs.append(jnp.ones((B, hw, 1), jnp.bfloat16))
    x_cat = jnp.concatenate(slabs, axis=2)                              # (B, HW, 7C+1)

    # static presence mask (only emitted when some modality is missing; each presence
    # pattern is its own kernel specialization, as before).
    feat_mask = None
    if not all(present):
        feat_mask = tuple(float(p) for p in present for _ in range(F))

    operands = (x_cat, packed["wbd"], packed["wn"], packed["bn"],
                packed["wh"], packed["bh"])
    n_feat = len(MODALITIES) * F
    cls_pad = packed["cls_pad"]

    # advisory cost estimate for XLA's scheduler
    flops = (2 * B * hw * x_cat.shape[2] * n_feat          # block-diagonal backbone
             + 2 * B * hw * n_feat                         # relu + GAP
             + 2 * B * n_feat * packed["fuse_dim"]         # neck
             + 2 * B * packed["fuse_dim"] * cls_pad)       # head
    bytes_accessed = (sum(int(a.size) * int(a.dtype.itemsize) for a in operands)
                      + B * cls_pad * 4)

    vmem = pltpu.MemorySpace.VMEM
    out = pl.pallas_call(
        functools.partial(_fused_forward_kernel, inv_hw=1.0 / hw, feat_mask=feat_mask),
        out_shape=jax.ShapeDtypeStruct((B, cls_pad), jnp.float32),
        in_specs=[pl.BlockSpec(memory_space=vmem)] * len(operands),
        out_specs=pl.BlockSpec(memory_space=vmem),
        scratch_shapes=[pltpu.VMEM((B, n_feat), jnp.float32)],
        cost_estimate=pl.CostEstimate(flops=int(flops), transcendentals=0,
                                      bytes_accessed=int(bytes_accessed)),
    )(*operands)
    return out[:, :packed["num_classes"]]


# ------------------------------------------------------------------
# Params + pure-JAX reference (sanity check)
# ------------------------------------------------------------------
def init_params(key, in_channels, feat_dim, fuse_dim, num_classes):
    params = {"backbones": {}}
    keys = jax.random.split(key, len(MODALITIES) + 2)
    for i, m in enumerate(MODALITIES):
        kw, kb = jax.random.split(keys[i])
        params["backbones"][m] = {
            "w": jax.random.normal(kw, (in_channels, feat_dim), jnp.float32) * 0.1,
            "b": jax.random.normal(kb, (feat_dim,), jnp.float32) * 0.01,
        }
    kw, kb = jax.random.split(keys[-2])
    params["neck"] = {
        "w": jax.random.normal(kw, (len(MODALITIES) * feat_dim, fuse_dim),
                               jnp.float32) * 0.1,
        "b": jax.random.normal(kb, (fuse_dim,), jnp.float32) * 0.01,
    }
    kw, kb = jax.random.split(keys[-1])
    params["head"] = {
        "w": jax.random.normal(kw, (fuse_dim, num_classes), jnp.float32) * 0.1,
        "b": jax.random.normal(kb, (num_classes,), jnp.float32) * 0.01,
    }
    return params


def _reference_forward(params, modal_inputs):
    feats = []
    for m in MODALITIES:
        x = modal_inputs[m]                                # (B, C, H, W)
        p = params["backbones"][m]
        y = jnp.einsum("bchw,cf->bfhw", x, p["w"]) + p["b"][None, :, None, None]
        y = jnp.maximum(y, 0.0)
        feats.append(jnp.mean(y, axis=(2, 3)))             # (B, F)
    fused = jnp.concatenate(feats, axis=1)                 # (B, 7F)
    neck = jnp.maximum(fused @ params["neck"]["w"] + params["neck"]["b"], 0.0)
    return neck @ params["head"]["w"] + params["head"]["b"]


# ------------------------------------------------------------------
if __name__ == "__main__":
    B, C, H, W = 2, 4, 16, 16
    FEAT, FUSE, NUM_CLASSES = 32, 32, 10

    key = jax.random.PRNGKey(0)
    pkey, dkey = jax.random.split(key)
    params = init_params(pkey, C, FEAT, FUSE, NUM_CLASSES)
    packed = pack_params(params)                           # pre-packed ONCE

    mkeys = jax.random.split(dkey, len(MODALITIES))
    modal_inputs = {
        m: jax.random.normal(mkeys[i], (B, C, H, W), jnp.float32)
        for i, m in enumerate(MODALITIES)
    }

    cls_score = multimodal_forward(packed, **modal_inputs)
    cls_score = jax.block_until_ready(cls_score)

    assert cls_score.shape == (B, NUM_CLASSES)
    assert bool(jnp.all(jnp.isfinite(cls_score)))
    ref = _reference_forward(params, modal_inputs)
    assert bool(jnp.allclose(cls_score, ref, rtol=2e-2, atol=2e-2)), \
        "fused Pallas forward disagrees with reference"
    print("KERNEL_OK")
</pallas_src>

<mosaic_0001>
module attributes {stable_mosaic.version = 11 : i64} {
  func.func @_fused_forward_kernel(%arg0: memref<2x256x29xbf16, #tpu.memory_space<vmem>>, %arg1: memref<29x224xbf16, #tpu.memory_space<vmem>>, %arg2: memref<224x32xf32, #tpu.memory_space<vmem>>, %arg3: memref<1x32xf32, #tpu.memory_space<vmem>>, %arg4: memref<32x128xf32, #tpu.memory_space<vmem>>, %arg5: memref<1x128xf32, #tpu.memory_space<vmem>>, %arg6: memref<2x128xf32, #tpu.memory_space<vmem>>, %arg7: memref<2x224xf32, #tpu.memory_space<vmem>>) attributes {dimension_semantics = [], scalar_prefetch = 0 : i64, scratch_operands = 1 : i64, tpu.core_type = #tpu.core_type<tc>} {
    %cst = arith.constant 0.000000e+00 : f32
    %0 = vector.broadcast %cst : f32 to vector<2x224xf32>
    %c0 = arith.constant 0 : index
    %c0_0 = arith.constant 0 : index
    %1 = vector.load %arg7[%c0, %c0_0] : memref<2x224xf32, #tpu.memory_space<vmem>>, vector<2x224xf32>
    tpu.vector_store %arg7[%c0, %c0_0], %0 {strides = array<i32>} : memref<2x224xf32, #tpu.memory_space<vmem>>, vector<2x224xf32>,
    %c0_i32 = arith.constant 0 : i32
    %c2_i32 = arith.constant 2 : i32
    %2 = arith.addi %c0_i32, %c2_i32 : i32
    %c1_i32 = arith.constant 1 : i32
    scf.for %arg8 = %c0_i32 to %2 step %c1_i32  : i32 {
      %17 = arith.index_cast %arg8 : i32 to index
      %c0_17 = arith.constant 0 : index
      %c0_18 = arith.constant 0 : index
      %18 = vector.load %arg0[%17, %c0_17, %c0_18] : memref<2x256x29xbf16, #tpu.memory_space<vmem>>, vector<1x256x29xbf16>
      %19 = vector.shape_cast %18 : vector<1x256x29xbf16> to vector<256x29xbf16>
      %c0_19 = arith.constant 0 : index
      %c0_20 = arith.constant 0 : index
      %20 = vector.load %arg1[%c0_19, %c0_20] : memref<29x224xbf16, #tpu.memory_space<vmem>>, vector<29x224xbf16>
      %cst_21 = arith.constant dense<0.000000e+00> : vector<256x224xf32>
      %21 = tpu.matmul %19, %20, %cst_21 {dimension_numbers = #tpu.dot_dimension_numbers<[1], [0], [0], [1], [0, 0, 1, 1], [], []>} : vector<256x29xbf16>, vector<29x224xbf16>, vector<256x224xf32> -> vector<256x224xf32>
      %cst_22 = arith.constant 0.000000e+00 : f32
      %22 = vector.broadcast %cst_22 : f32 to vector<256x224xf32>
      %23 = arith.maximumf %21, %22 : vector<256x224xf32>
      %cst_23 = arith.constant dense<0.000000e+00> : vector<224xf32>
      %24 = vector.multi_reduction <add>, %23, %cst_23 [0] : vector<256x224xf32> to vector<224xf32>
      %25 = vector.shape_cast %24 : vector<224xf32> to vector<1x224xf32>
      %cst_24 = arith.constant 3.906250e-03 : f32
      %26 = vector.broadcast %cst_24 : f32 to vector<1x224xf32>
      %27 = arith.mulf %25, %26 : vector<1x224xf32>
      %28 = tpu.iota {dimensions = array<i32: 0>} : vector<2x1xi32>
      %29 = vector.broadcast %arg8 : i32 to vector<2x1xi32>
      %30 = arith.cmpi eq, %28, %29 : vector<2x1xi32>
      %c0_25 = arith.constant 0 : index
      %c0_26 = arith.constant 0 : index
      %31 = vector.load %arg7[%c0_25, %c0_26] : memref<2x224xf32, #tpu.memory_space<vmem>>, vector<2x224xf32>
      %32 = vector.shape_cast %30 : vector<2x1xi1> to vector<2x1xi1>
      %33 = vector.broadcast %32 : vector<2x1xi1> to vector<2x224xi1>
      %34 = vector.shape_cast %27 : vector<1x224xf32> to vector<1x224xf32>
      %35 = vector.broadcast %34 : vector<1x224xf32> to vector<2x224xf32>
      %36 = arith.select %33, %35, %31 : vector<2x224xi1>, vector<2x224xf32>
      %c0_27 = arith.constant 0 : index
      %c0_28 = arith.constant 0 : index
      %37 = vector.load %arg7[%c0_27, %c0_28] : memref<2x224xf32, #tpu.memory_space<vmem>>, vector<2x224xf32>
      tpu.vector_store %arg7[%c0_27, %c0_28], %36 {strides = array<i32>} : memref<2x224xf32, #tpu.memory_space<vmem>>, vector<2x224xf32>,
    }
    %c2_i32_1 = arith.constant 2 : i32
    %c0_2 = arith.constant 0 : index
    %c0_3 = arith.constant 0 : index
    %3 = vector.load %arg7[%c0_2, %c0_3] : memref<2x224xf32, #tpu.memory_space<vmem>>, vector<2x224xf32>
    %c0_4 = arith.constant 0 : index
    %c0_5 = arith.constant 0 : index
    %4 = vector.load %arg2[%c0_4, %c0_5] : memref<224x32xf32, #tpu.memory_space<vmem>>, vector<224x32xf32>
    %cst_6 = arith.constant dense<0.000000e+00> : vector<2x32xf32>
    %5 = tpu.matmul %3, %4, %cst_6 {dimension_numbers = #tpu.dot_dimension_numbers<[1], [0], [0], [1], [0, 0, 1, 1], [], []>} : vector<2x224xf32>, vector<224x32xf32>, vector<2x32xf32> -> vector<2x32xf32>
    %c0_7 = arith.constant 0 : index
    %c0_8 = arith.constant 0 : index
    %6 = vector.load %arg3[%c0_7, %c0_8] : memref<1x32xf32, #tpu.memory_space<vmem>>, vector<1x32xf32>
    %7 = vector.broadcast %6 : vector<1x32xf32> to vector<2x32xf32>
    %8 = arith.addf %5, %7 : vector<2x32xf32>
    %cst_9 = arith.constant 0.000000e+00 : f32
    %9 = vector.broadcast %cst_9 : f32 to vector<2x32xf32>
    %10 = arith.maximumf %8, %9 : vector<2x32xf32>
    %c0_10 = arith.constant 0 : index
    %c0_11 = arith.constant 0 : index
    %11 = vector.load %arg4[%c0_10, %c0_11] : memref<32x128xf32, #tpu.memory_space<vmem>>, vector<32x128xf32>
    %cst_12 = arith.constant dense<0.000000e+00> : vector<2x128xf32>
    %12 = tpu.matmul %10, %11, %cst_12 {dimension_numbers = #tpu.dot_dimension_numbers<[1], [0], [0], [1], [0, 0, 1, 1], [], []>} : vector<2x32xf32>, vector<32x128xf32>, vector<2x128xf32> -> vector<2x128xf32>
    %c0_13 = arith.constant 0 : index
    %c0_14 = arith.constant 0 : index
    %13 = vector.load %arg5[%c0_13, %c0_14] : memref<1x128xf32, #tpu.memory_space<vmem>>, vector<1x128xf32>
    %14 = vector.broadcast %13 : vector<1x128xf32> to vector<2x128xf32>
    %15 = arith.addf %12, %14 : vector<2x128xf32>
    %c0_15 = arith.constant 0 : index
    %c0_16 = arith.constant 0 : index
    %16 = vector.load %arg6[%c0_15, %c0_16] : memref<2x128xf32, #tpu.memory_space<vmem>>, vector<2x128xf32>
    tpu.vector_store %arg6[%c0_15, %c0_16], %15 {strides = array<i32>} : memref<2x128xf32, #tpu.memory_space<vmem>>, vector<2x128xf32>,
    return
  }
}

</mosaic_0001>

<llo_original>
// kernel: tpu_custom_call.1
$region0: #{tpu_custom_call.1}
  #allocation0 [shape = 'u32[]', space=smem, size = 0x4, offset = 0x4, fixed_abs, tag = 'smem constant byte address 0x4 - core index']
  #allocation1 [shape = 'u32[72,128]{1,0:T(1,128)}', space=vmem, size = 0x9000, scoped, tag = 'internal scratch']
  #allocation2 [shape = 'f32[2,224]{1,0:T(2,128)}', space=vmem, size = 0x800, scoped, tag = 'scratch operand']
  %s0 = inlined_call_operand.vmem [shape: bf16[2,256,29], index: 0, kind: input, shape index: {}]
  %s1 = inlined_call_operand.vmem [shape: bf16[29,224], index: 1, kind: input, shape index: {}]
  %s2 = inlined_call_operand.vmem [shape: f32[224,32], index: 2, kind: input, shape index: {}]
  %s3 = inlined_call_operand.vmem [shape: f32[1,32], index: 3, kind: input, shape index: {}]
  %s4 = inlined_call_operand.vmem [shape: f32[32,128], index: 4, kind: input, shape index: {}]
  %s5 = inlined_call_operand.vmem [shape: f32[1,128], index: 5, kind: input, shape index: {}]
  %s6 = inlined_call_operand.hbm [shape: f32[2,128], index: 6, kind: output, shape index: {}]
  %s7 = sld [smem:[#allocation0]]
  $region41: #{tpu_custom_call.1} parent=0
    _
  %s9 = ssub.s32 1, %s7
  %s10 = scalar_select 0, %s9, %s7
  $region1: #{tpu_custom_call.1} parent=0
    #allocation3 [shape = 'u8[1024]{0}', space=vmem, size = 0x400, scoped, tag = 'output window, operand 0, single buffered']
    #allocation4 [shape = 's32[1]{0}', space=sflag, size = 0x4, scoped, tag = 'scoped memory for tpu_custom_call.1']
    %11 = vsyncpa [#allocation4], 0
    // Predicated region
    $region2: #{tpu_custom_call.1} parent=1 // pred_check
      _
    $region3: #{tpu_custom_call.1} parent=1 // pred_check_branch
      %13 = sbr.rel (0) target = $region5
    $region4: #{tpu_custom_call.1} parent=1 // pred_region
      _
    $region5: #{tpu_custom_call.1} parent=1 // pred_fallthru
      _
    // Predicated region
    $region6: #{tpu_custom_call.1} parent=1 // pred_check
      _
    $region7: #{tpu_custom_call.1} parent=1 // pred_check_branch
      %15 = sbr.rel (0) target = $region9
    $region8: #{tpu_custom_call.1} parent=1 // pred_region
      _
    $region9: #{tpu_custom_call.1} parent=1 // pred_fallthru
      _
    // Predicated region
    $region10: #{tpu_custom_call.1} parent=1 // pred_check
      _
    $region11: #{tpu_custom_call.1} parent=1 // pred_check_branch
      %17 = sbr.rel (0) target = $region13
    $region12: #{tpu_custom_call.1} parent=1 // pred_region
      _
    $region13: #{tpu_custom_call.1} parent=1 // pred_fallthru
      _
    // Predicated region
    $region14: #{tpu_custom_call.1} parent=1 // pred_check
      _
    $region15: #{tpu_custom_call.1} parent=1 // pred_check_branch
      %19 = sbr.rel (0) target = $region17
    $region16: #{tpu_custom_call.1} parent=1 // pred_region
      _
    $region17: #{tpu_custom_call.1} parent=1 // pred_fallthru
      _
    // Predicated region
    $region18: #{tpu_custom_call.1} parent=1 // pred_check
      _
    $region19: #{tpu_custom_call.1} parent=1 // pred_check_branch
      %21 = sbr.rel (0) target = $region21
    $region20: #{tpu_custom_call.1} parent=1 // pred_region
      _
    $region21: #{tpu_custom_call.1} parent=1 // pred_fallthru
      _
    // Predicated region
    $region22: #{tpu_custom_call.1} parent=1 // pred_check
      _
    $region23: #{tpu_custom_call.1} parent=1 // pred_check_branch
      %23 = sbr.rel (0) target = $region25
    $region24: #{tpu_custom_call.1} parent=1 // pred_region
      _
    $region25: #{tpu_custom_call.1} parent=1 // pred_fallthru
      _
    %vm25 = vcmask 1041408
    %vm26 = vcmask 781314
    %vm27 = vmor %vm26, %vm25
    %28 = vst.msk [vmem:[#allocation2] sm:$0xf] %vm27, 0.0
    loop: start=0, step=1, limit=2
    $region26: #{tpu_custom_call.1} parent=1 // loop_pre_header
      _
    $region27: #{tpu_custom_call.1} parent=1 // loop_header
      %s30 = sphi 0, %s34
      %p31 = scmp.ge.s32.totalorder %s30, 2
    $region28: #{tpu_custom_call.1} parent=1 // loop_header_branch
      %33 = sbr.rel (%p31) target = $region32
    $region29: #{tpu_custom_call.1} parent=1 // loop_body
      %s35 = smul.u32 %s30, 32
      %s36 = smul.addr %s35, 4
      %s37 = scalar_lea.vmem %s0, %s36
      %v38 = vld [vmem:[%s37] sm:$0xf]
      %v39 = vld [vmem:[%s37 + $0x4] sm:$0xf]
      %v40 = vld [vmem:[%s37 + $0x8] sm:$0xf]
      %v41 = vld [vmem:[%s37 + $0xc] sm:$0xf]
      %v42 = vld [vmem:[%s37 + $0x10] sm:$0xf]
      %v43 = vld [vmem:[%s37 + $0x14] sm:$0xf]
      %v44 = vld [vmem:[%s37 + $0x18] sm:$0xf]
      %v45 = vld [vmem:[%s37 + $0x1c] sm:$0xf]
      %v46 = vld [vmem:[%s37 + $0x20] sm:$0xf]
      %v47 = vld [vmem:[%s37 + $0x24] sm:$0xf]
      %v48 = vld [vmem:[%s37 + $0x28] sm:$0xf]
      %v49 = vld [vmem:[%s37 + $0x2c] sm:$0xf]
      %v50 = vld [vmem:[%s37 + $0x30] sm:$0xf]
      %v51 = vld [vmem:[%s37 + $0x34] sm:$0xf]
      %v52 = vld [vmem:[%s37 + $0x38] sm:$0xf]
      %v53 = vld [vmem:[%s37 + $0x3c] sm:$0xf]
      %v54 = vld [vmem:[%s37 + $0x40] sm:$0xf]
      %v55 = vld [vmem:[%s37 + $0x44] sm:$0xf]
      %v56 = vld [vmem:[%s37 + $0x48] sm:$0xf]
      %v57 = vld [vmem:[%s37 + $0x4c] sm:$0xf]
      %v58 = vld [vmem:[%s37 + $0x50] sm:$0xf]
      %v59 = vld [vmem:[%s37 + $0x54] sm:$0xf]
      %v60 = vld [vmem:[%s37 + $0x58] sm:$0xf]
      %v61 = vld [vmem:[%s37 + $0x5c] sm:$0xf]
      %v62 = vld [vmem:[%s37 + $0x60] sm:$0xf]
      %v63 = vld [vmem:[%s37 + $0x64] sm:$0xf]
      %v64 = vld [vmem:[%s37 + $0x68] sm:$0xf]
      %v65 = vld [vmem:[%s37 + $0x6c] sm:$0xf]
      %v66 = vld [vmem:[%s37 + $0x70] sm:$0xf]
      %v67 = vld [vmem:[%s37 + $0x74] sm:$0xf]
      %v68 = vld [vmem:[%s37 + $0x78] sm:$0xf]
      %v69 = vld [vmem:[%s37 + $0x7c] sm:$0xf]
      %v70 = vld [vmem:[%s1] sm:$0xff]
      %v71 = vld [vmem:[%s1 + $0x8] sm:$0xff]
      %v72 = vld [vmem:[%s1 + $0x10] sm:$0xff]
      %v73 = vld [vmem:[%s1 + $0x18] sm:$0x77]
      %v106 = vunpack.c.l.b16 %v38
      %v107 = vunpack.c.l.b16 %v39
      %v108 = vunpack.c.l.b16 %v40
      %v109 = vunpack.c.l.b16 %v41
      %v110 = vunpack.c.l.b16 %v42
      %v111 = vunpack.c.l.b16 %v43
      %v112 = vunpack.c.l.b16 %v44
      %v113 = vunpack.c.l.b16 %v45
      %v114 = vunpack.c.l.b16 %v46
      %v115 = vunpack.c.l.b16 %v47
      %v116 = vunpack.c.l.b16 %v48
      %v117 = vunpack.c.l.b16 %v49
      %v118 = vunpack.c.l.b16 %v50
      %v119 = vunpack.c.l.b16 %v51
      %v120 = vunpack.c.l.b16 %v52
      %v121 = vunpack.c.l.b16 %v53
      %v122 = vunpack.c.l.b16 %v54
      %v123 = vunpack.c.l.b16 %v55
      %v124 = vunpack.c.l.b16 %v56
      %v125 = vunpack.c.l.b16 %v57
      %v126 = vunpack.c.l.b16 %v58
      %v127 = vunpack.c.l.b16 %v59
      %v128 = vunpack.c.l.b16 %v60
      %v129 = vunpack.c.l.b16 %v61
      %v130 = vunpack.c.l.b16 %v62
      %v131 = vunpack.c.l.b16 %v63
      %v132 = vunpack.c.l.b16 %v64
      %v133 = vunpack.c.l.b16 %v65
      %v134 = vunpack.c.l.b16 %v66
      %v135 = vunpack.c.l.b16 %v67
      %v136 = vunpack.c.l.b16 %v68
      %v137 = vunpack.c.l.b16 %v69
      %v138 = vpack.c.b16 %v107, %v106
      %v139 = vpack.c.b16 %v109, %v108
      %v140 = vpack.c.b16 %v111, %v110
      %v141 = vpack.c.b16 %v113, %v112
      %v142 = vpack.c.b16 %v115, %v114
      %v143 = vpack.c.b16 %v117, %v116
      %v144 = vpack.c.b16 %v119, %v118
      %v145 = vpack.c.b16 %v121, %v120
      %v146 = vpack.c.b16 %v123, %v122
      %v147 = vpack.c.b16 %v125, %v124
      %v148 = vpack.c.b16 %v127, %v126
      %v149 = vpack.c.b16 %v129, %v128
      %v150 = vpack.c.b16 %v131, %v130
      %v151 = vpack.c.b16 %v133, %v132
      %v152 = vpack.c.b16 %v135, %v134
      %v153 = vpack.c.b16 %v137, %v136
      %v158 = vunpack.c.l.b16 %v70
      %v159 = vunpack.c.h.b16 %v70
      %v160 = vunpack.c.l.b16 %v71
      %v161 = vunpack.c.h.b16 %v71
      %v162 = vunpack.c.l.b16 %v72
      %v163 = vunpack.c.h.b16 %v72
      %v164 = vunpack.c.l.b16 %v73
      %v165 = vunpack.c.h.b16 %v73
      %v166 = vpack.c.b16 %v160, %v158
      %v167 = vpack.c.b16 %v161, %v159
      %v168 = vpack.c.b16 %v164, %v162
      %v169 = vpack.c.b16 %v165, %v163
      %vm172 = vcmask 236544
      %v174 = vsel %vm172, %v138, 0
      %v177 = vsel %vm172, %v139, 0
      %v180 = vsel %vm172, %v140, 0
      %v183 = vsel %vm172, %v141, 0
      %v186 = vsel %vm172, %v142, 0
      %v189 = vsel %vm172, %v143, 0
      %v192 = vsel %vm172, %v144, 0
      %v195 = vsel %vm172, %v145, 0
      %v198 = vsel %vm172, %v146, 0
      %v201 = vsel %vm172, %v147, 0
      %v204 = vsel %vm172, %v148, 0
      %v207 = vsel %vm172, %v149, 0
      %v210 = vsel %vm172, %v150, 0
      %v213 = vsel %vm172, %v151, 0
      %v216 = vsel %vm172, %v152, 0
      %v219 = vsel %vm172, %v153, 0
      %vm221 = vcmask 1045504
      %vm222 = vcmask 1046528
      %v223 = vsel %vm221, 4294967295, 65535
      %v224 = vsel %vm222, %v223, 0
      %v226 = vand.u32 %v168, %v224
      %v229 = vand.u32 %v169, %v224
      %231 = vmatpush.bf16.msra.mxu0 0
      %232 = vmatpush.bf16.msra.mxu0 0
      %233 = vmatpush.bf16.msra.mxu0 0
      %234 = vmatpush.bf16.msra.mxu0 0
      %235 = vmatpush.bf16.msra.mxu0 0
      %236 = vmatpush.bf16.msra.mxu0 0
      %237 = vmatpush.bf16.msra.mxu0 %v226
      %238 = vmatpush.bf16.msra.mxu0 %v166
      %239 = vmatmul.bf16.gmra.mxu0 %v174
      %v240 = vpop.f32.mrf.mxu0
      %v241 = vadd.f32 0.0, %v240
      %v242 = vpop.f32.mrf.mxu0
      %v243 = vadd.f32 0.0, %v242
      %244 = vmatmul.bf16.gmra.mxu0 %v177
      %v245 = vpop.f32.mrf.mxu0
      %v246 = vadd.f32 0.0, %v245
      %v247 = vpop.f32.mrf.mxu0
      %v248 = vadd.f32 0.0, %v247
      %249 = vmatmul.bf16.gmra.mxu0 %v180
      %v250 = vpop.f32.mrf.mxu0
      %v251 = vadd.f32 0.0, %v250
      %v252 = vpop.f32.mrf.mxu0
      %v253 = vadd.f32 0.0, %v252
      %254 = vmatmul.bf16.gmra.mxu0 %v183
      %v255 = vpop.f32.mrf.mxu0
      %v256 = vadd.f32 0.0, %v255
      %v257 = vpop.f32.mrf.mxu0
      %v258 = vadd.f32 0.0, %v257
      %259 = vmatmul.bf16.gmra.mxu0 %v186
      %v260 = vpop.f32.mrf.mxu0
      %v261 = vadd.f32 0.0, %v260
      %v262 = vpop.f32.mrf.mxu0
      %v263 = vadd.f32 0.0, %v262
      %264 = vmatmul.bf16.gmra.mxu0 %v189
      %v265 = vpop.f32.mrf.mxu0
      %v266 = vadd.f32 0.0, %v265
      %v267 = vpop.f32.mrf.mxu0
      %v268 = vadd.f32 0.0, %v267
      %269 = vmatmul.bf16.gmra.mxu0 %v192
      %v270 = vpop.f32.mrf.mxu0
      %v271 = vadd.f32 0.0, %v270
      %v272 = vpop.f32.mrf.mxu0
      %v273 = vadd.f32 0.0, %v272
      %274 = vmatmul.bf16.gmra.mxu0 %v195
      %v275 = vpop.f32.mrf.mxu0
      %v276 = vadd.f32 0.0, %v275
      %v277 = vpop.f32.mrf.mxu0
      %v278 = vadd.f32 0.0, %v277
      %279 = vmatmul.bf16.gmra.mxu0 %v198
      %v280 = vpop.f32.mrf.mxu0
      %v281 = vadd.f32 0.0, %v280
      %v282 = vpop.f32.mrf.mxu0
      %v283 = vadd.f32 0.0, %v282
      %284 = vmatmul.bf16.gmra.mxu0 %v201
      %v285 = vpop.f32.mrf.mxu0
      %v286 = vadd.f32 0.0, %v285
      %v287 = vpop.f32.mrf.mxu0
      %v288 = vadd.f32 0.0, %v287
      %289 = vmatmul.bf16.gmra.mxu0 %v204
      %v290 = vpop.f32.mrf.mxu0
      %v291 = vadd.f32 0.0, %v290
      %v292 = vpop.f32.mrf.mxu0
      %v293 = vadd.f32 0.0, %v292
      %294 = vmatmul.bf16.gmra.mxu0 %v207
      %v295 = vpop.f32.mrf.mxu0
      %v296 = vadd.f32 0.0, %v295
      %v297 = vpop.f32.mrf.mxu0
      %v298 = vadd.f32 0.0, %v297
      %299 = vmatmul.bf16.gmra.mxu0 %v210
      %v300 = vpop.f32.mrf.mxu0
      %v301 = vadd.f32 0.0, %v300
      %v302 = vpop.f32.mrf.mxu0
      %v303 = vadd.f32 0.0, %v302
      %304 = vmatmul.bf16.gmra.mxu0 %v213
      %v305 = vpop.f32.mrf.mxu0
      %v306 = vadd.f32 0.0, %v305
      %v307 = vpop.f32.mrf.mxu0
      %v308 = vadd.f32 0.0, %v307
      %309 = vmatmul.bf16.gmra.mxu0 %v216
      %v310 = vpop.f32.mrf.mxu0
      %v311 = vadd.f32 0.0, %v310
      %v312 = vpop.f32.mrf.mxu0
      %v313 = vadd.f32 0.0, %v312
      %314 = vmatmul.bf16.gmra.mxu0 %v219
      %v315 = vpop.f32.mrf.mxu0
      %v316 = vadd.f32 0.0, %v315
      %v317 = vpop.f32.mrf.mxu0
      %v318 = vadd.f32 0.0, %v317
      %319 = vdwg.mxu0
      %320 = vmatpush.bf16.msra.mxu0 0
      %321 = vmatpush.bf16.msra.mxu0 0
      %322 = vmatpush.bf16.msra.mxu0 0
      %323 = vmatpush.bf16.msra.mxu0 0
      %324 = vmatpush.bf16.msra.mxu0 0
      %325 = vmatpush.bf16.msra.mxu0 0
      %326 = vmatpush.bf16.msra.mxu0 %v229
      %327 = vmatpush.bf16.msra.mxu0 %v167
      %328 = vmatmul.bf16.gmra.mxu0 %v174
      %v329 = vpop.f32.mrf.mxu0
      %v330 = vadd.f32 0.0, %v329
      %v331 = vpop.f32.mrf.mxu0
      %v332 = vadd.f32 0.0, %v331
      %333 = vmatmul.bf16.gmra.mxu0 %v177
      %v334 = vpop.f32.mrf.mxu0
      %v335 = vadd.f32 0.0, %v334
      %v336 = vpop.f32.mrf.mxu0
      %v337 = vadd.f32 0.0, %v336
      %338 = vmatmul.bf16.gmra.mxu0 %v180
      %v339 = vpop.f32.mrf.mxu0
      %v340 = vadd.f32 0.0, %v339
      %v341 = vpop.f32.mrf.mxu0
      %v342 = vadd.f32 0.0, %v341
      %343 = vmatmul.bf16.gmra.mxu0 %v183
      %v344 = vpop.f32.mrf.mxu0
      %v345 = vadd.f32 0.0, %v344
      %v346 = vpop.f32.mrf.mxu0
      %v347 = vadd.f32 0.0, %v346
      %348 = vmatmul.bf16.gmra.mxu0 %v186
      %v349 = vpop.f32.mrf.mxu0
      %v350 = vadd.f32 0.0, %v349
      %v351 = vpop.f32.mrf.mxu0
      %v352 = vadd.f32 0.0, %v351
      %353 = vmatmul.bf16.gmra.mxu0 %v189
      %v354 = vpop.f32.mrf.mxu0
      %v355 = vadd.f32 0.0, %v354
      %v356 = vpop.f32.mrf.mxu0
      %v357 = vadd.f32 0.0, %v356
      %358 = vmatmul.bf16.gmra.mxu0 %v192
      %v359 = vpop.f32.mrf.mxu0
      %v360 = vadd.f32 0.0, %v359
      %v361 = vpop.f32.mrf.mxu0
      %v362 = vadd.f32 0.0, %v361
      %363 = vmatmul.bf16.gmra.mxu0 %v195
      %v364 = vpop.f32.mrf.mxu0
      %v365 = vadd.f32 0.0, %v364
      %v366 = vpop.f32.mrf.mxu0
      %v367 = vadd.f32 0.0, %v366
      %368 = vmatmul.bf16.gmra.mxu0 %v198
      %v369 = vpop.f32.mrf.mxu0
      %v370 = vadd.f32 0.0, %v369
      %v371 = vpop.f32.mrf.mxu0
      %v372 = vadd.f32 0.0, %v371
      %373 = vmatmul.bf16.gmra.mxu0 %v201
      %v374 = vpop.f32.mrf.mxu0
      %v375 = vadd.f32 0.0, %v374
      %v376 = vpop.f32.mrf.mxu0
      %v377 = vadd.f32 0.0, %v376
      %378 = vmatmul.bf16.gmra.mxu0 %v204
      %v379 = vpop.f32.mrf.mxu0
      %v380 = vadd.f32 0.0, %v379
      %v381 = vpop.f32.mrf.mxu0
      %v382 = vadd.f32 0.0, %v381
      %383 = vmatmul.bf16.gmra.mxu0 %v207
      %v384 = vpop.f32.mrf.mxu0
      %v385 = vadd.f32 0.0, %v384
      %v386 = vpop.f32.mrf.mxu0
      %v387 = vadd.f32 0.0, %v386
      %388 = vmatmul.bf16.gmra.mxu0 %v210
      %v389 = vpop.f32.mrf.mxu0
      %v390 = vadd.f32 0.0, %v389
      %v391 = vpop.f32.mrf.mxu0
      %v392 = vadd.f32 0.0, %v391
      %393 = vmatmul.bf16.gmra.mxu0 %v213
      %v394 = vpop.f32.mrf.mxu0
      %v395 = vadd.f32 0.0, %v394
      %v396 = vpop.f32.mrf.mxu0
      %v397 = vadd.f32 0.0, %v396
      %398 = vmatmul.bf16.gmra.mxu0 %v216
      %v399 = vpop.f32.mrf.mxu0
      %v400 = vadd.f32 0.0, %v399
      %v401 = vpop.f32.mrf.mxu0
      %v402 = vadd.f32 0.0, %v401
      %403 = vmatmul.bf16.gmra.mxu0 %v219
      %v404 = vpop.f32.mrf.mxu0
      %v405 = vadd.f32 0.0, %v404
      %v406 = vpop.f32.mrf.mxu0
      %v407 = vadd.f32 0.0, %v406
      %408 = vdwg.mxu0
      %v409 = vmax.f32 %v241, 0.0
      %v410 = vmax.f32 %v330, 0.0
      %v411 = vmax.f32 %v243, 0.0
      %v412 = vmax.f32 %v332, 0.0
      %v413 = vmax.f32 %v246, 0.0
      %v414 = vmax.f32 %v335, 0.0
      %v415 = vmax.f32 %v248, 0.0
      %v416 = vmax.f32 %v337, 0.0
      %v417 = vmax.f32 %v251, 0.0
      %v418 = vmax.f32 %v340, 0.0
      %v419 = vmax.f32 %v253, 0.0
      %v420 = vmax.f32 %v342, 0.0
      %v421 = vmax.f32 %v256, 0.0
      %v422 = vmax.f32 %v345, 0.0
      %v423 = vmax.f32 %v258, 0.0
      %v424 = vmax.f32 %v347, 0.0
      %v425 = vmax.f32 %v261, 0.0
      %v426 = vmax.f32 %v350, 0.0
      %v427 = vmax.f32 %v263, 0.0
      %v428 = vmax.f32 %v352, 0.0
      %v429 = vmax.f32 %v266, 0.0
      %v430 = vmax.f32 %v355, 0.0
      %v431 = vmax.f32 %v268, 0.0
      %v432 = vmax.f32 %v357, 0.0
      %v433 = vmax.f32 %v271, 0.0
      %v434 = vmax.f32 %v360, 0.0
      %v435 = vmax.f32 %v273, 0.0
      %v436 = vmax.f32 %v362, 0.0
      %v437 = vmax.f32 %v276, 0.0
      %v438 = vmax.f32 %v365, 0.0
      %v439 = vmax.f32 %v278, 0.0
      %v440 = vmax.f32 %v367, 0.0
      %v441 = vmax.f32 %v281, 0.0
      %v442 = vmax.f32 %v370, 0.0
      %v443 = vmax.f32 %v283, 0.0
      %v444 = vmax.f32 %v372, 0.0
      %v445 = vmax.f32 %v286, 0.0
      %v446 = vmax.f32 %v375, 0.0
      %v447 = vmax.f32 %v288, 0.0
      %v448 = vmax.f32 %v377, 0.0
      %v449 = vmax.f32 %v291, 0.0
      %v450 = vmax.f32 %v380, 0.0
      %v451 = vmax.f32 %v293, 0.0
      %v452 = vmax.f32 %v382, 0.0
      %v453 = vmax.f32 %v296, 0.0
      %v454 = vmax.f32 %v385, 0.0
      %v455 = vmax.f32 %v298, 0.0
      %v456 = vmax.f32 %v387, 0.0
      %v457 = vmax.f32 %v301, 0.0
      %v458 = vmax.f32 %v390, 0.0
      %v459 = vmax.f32 %v303, 0.0
      %v460 = vmax.f32 %v392, 0.0
      %v461 = vmax.f32 %v306, 0.0
      %v462 = vmax.f32 %v395, 0.0
      %v463 = vmax.f32 %v308, 0.0
      %v464 = vmax.f32 %v397, 0.0
      %v465 = vmax.f32 %v311, 0.0
      %v466 = vmax.f32 %v400, 0.0
      %v467 = vmax.f32 %v313, 0.0
      %v468 = vmax.f32 %v402, 0.0
      %v469 = vmax.f32 %v316, 0.0
      %v470 = vmax.f32 %v405, 0.0
      %v471 = vmax.f32 %v318, 0.0
      %v472 = vmax.f32 %v407, 0.0
      %v473 = vadd.f32 %v409, %v411
      %v474 = vadd.f32 %v473, %v413
      %v475 = vadd.f32 %v474, %v415
      %v476 = vadd.f32 %v475, %v417
      %v477 = vadd.f32 %v476, %v419
      %v478 = vadd.f32 %v477, %v421
      %v479 = vadd.f32 %v478, %v423
      %v480 = vadd.f32 %v479, %v425
      %v481 = vadd.f32 %v480, %v427
      %v482 = vadd.f32 %v481, %v429
      %v483 = vadd.f32 %v482, %v431
      %v484 = vadd.f32 %v483, %v433
      %v485 = vadd.f32 %v484, %v435
      %v486 = vadd.f32 %v485, %v437
      %v487 = vadd.f32 %v486, %v439
      %v488 = vadd.f32 %v487, %v441
      %v489 = vadd.f32 %v488, %v443
      %v490 = vadd.f32 %v489, %v445
      %v491 = vadd.f32 %v490, %v447
      %v492 = vadd.f32 %v491, %v449
      %v493 = vadd.f32 %v492, %v451
      %v494 = vadd.f32 %v493, %v453
      %v495 = vadd.f32 %v494, %v455
      %v496 = vadd.f32 %v495, %v457
      %v497 = vadd.f32 %v496, %v459
      %v498 = vadd.f32 %v497, %v461
      %v499 = vadd.f32 %v498, %v463
      %v500 = vadd.f32 %v499, %v465
      %v501 = vadd.f32 %v500, %v467
      %v502 = vadd.f32 %v501, %v469
      %v503 = vadd.f32 %v502, %v471
      %v504 = vrot.slane %v503, 4
      %v505 = vadd.f32 %v503, %v504
      %v506 = vrot.slane %v505, 2
      %v507 = vadd.f32 %v505, %v506
      %v508 = vrot.slane %v507, 1
      %v509 = vadd.f32 %v507, %v508
      %vm510 = vcmask 785408
      %v511 = vsel %vm510, %v410, 0.0
      %v512 = vsel %vm510, %v412, 0.0
      %v513 = vadd.f32 %v511, %v512
      %v514 = vsel %vm510, %v414, 0.0
      %v515 = vadd.f32 %v513, %v514
      %v516 = vsel %vm510, %v416, 0.0
      %v517 = vadd.f32 %v515, %v516
      %v518 = vsel %vm510, %v418, 0.0
      %v519 = vadd.f32 %v517, %v518
      %v520 = vsel %vm510, %v420, 0.0
      %v521 = vadd.f32 %v519, %v520
      %v522 = vsel %vm510, %v422, 0.0
      %v523 = vadd.f32 %v521, %v522
      %v524 = vsel %vm510, %v424, 0.0
      %v525 = vadd.f32 %v523, %v524
      %v526 = vsel %vm510, %v426, 0.0
      %v527 = vadd.f32 %v525, %v526
      %v528 = vsel %vm510, %v428, 0.0
      %v529 = vadd.f32 %v527, %v528
      %v530 = vsel %vm510, %v430, 0.0
      %v531 = vadd.f32 %v529, %v530
      %v532 = vsel %vm510, %v432, 0.0
      %v533 = vadd.f32 %v531, %v532
      %v534 = vsel %vm510, %v434, 0.0
      %v535 = vadd.f32 %v533, %v534
      %v536 = vsel %vm510, %v436, 0.0
      %v537 = vadd.f32 %v535, %v536
      %v538 = vsel %vm510, %v438, 0.0
      %v539 = vadd.f32 %v537, %v538
      %v540 = vsel %vm510, %v440, 0.0
      %v541 = vadd.f32 %v539, %v540
      %v542 = vsel %vm510, %v442, 0.0
      %v543 = vadd.f32 %v541, %v542
      %v544 = vsel %vm510, %v444, 0.0
      %v545 = vadd.f32 %v543, %v544
      %v546 = vsel %vm510, %v446, 0.0
      %v547 = vadd.f32 %v545, %v546
      %v548 = vsel %vm510, %v448, 0.0
      %v549 = vadd.f32 %v547, %v548
      %v550 = vsel %vm510, %v450, 0.0
      %v551 = vadd.f32 %v549, %v550
      %v552 = vsel %vm510, %v452, 0.0
      %v553 = vadd.f32 %v551, %v552
      %v554 = vsel %vm510, %v454, 0.0
      %v555 = vadd.f32 %v553, %v554
      %v556 = vsel %vm510, %v456, 0.0
      %v557 = vadd.f32 %v555, %v556
      %v558 = vsel %vm510, %v458, 0.0
      %v559 = vadd.f32 %v557, %v558
      %v560 = vsel %vm510, %v460, 0.0
      %v561 = vadd.f32 %v559, %v560
      %v562 = vsel %vm510, %v462, 0.0
      %v563 = vadd.f32 %v561, %v562
      %v564 = vsel %vm510, %v464, 0.0
      %v565 = vadd.f32 %v563, %v564
      %v566 = vsel %vm510, %v466, 0.0
      %v567 = vadd.f32 %v565, %v566
      %v568 = vsel %vm510, %v468, 0.0
      %v569 = vadd.f32 %v567, %v568
      %v570 = vsel %vm510, %v470, 0.0
      %v571 = vadd.f32 %v569, %v570
      %v572 = vsel %vm510, %v472, 0.0
      %v573 = vadd.f32 %v571, %v572
      %v574 = vrot.slane %v573, 4
      %v575 = vadd.f32 %v573, %v574
      %v576 = vrot.slane %v575, 2
      %v577 = vadd.f32 %v575, %v576
      %v578 = vrot.slane %v577, 1
      %v579 = vadd.f32 %v577, %v578
      %v580 = vmul.f32 %v509, 0.00390625
      %v581 = vmul.f32 %v579, 0.00390625
      %v582 = vlaneseq
      %v583 = vshrl.u32 %v582, 7
      %v584 = vstv %s30
      %vm585 = vcmp.eq.s32.totalorder %v583, %v584
      %v586 = vld [vmem:[#allocation2] sm:$0xf]
      %v587 = vsel %vm585, 1, 0
      %vm588 = vcmp.eq.s32.totalorder %v587, 1
      %590 = vst [vmem:[#allocation1] ss:$4 sm:$0xff] %v586
      %v591 = vld.sshfl [vmem:[#allocation1] sm:$0xff pattern:$0x73625140]
      %v592 = vld.sshfl [vmem:[#allocation1 + $0x8] sm:$0xff pattern:$0x73625140]
      %v595 = vsel %vm588, %v580, %v591
      %v596 = vsel %vm588, %v581, %v592
      %v599 = vrot.slane %v596, 6
      %v600 = vsel %vm25, %v595, %v599
      %602 = vst.msk [vmem:[#allocation2] sm:$0xf] %vm27, %v600
    $region30: #{tpu_custom_call.1} parent=1 // loop_footer
      %s34 = sadd.s32 1, %s30
    $region31: #{tpu_custom_call.1} parent=1 // loop_footer_branch
      %29 = sbr.rel target = $region27
    $region32: #{tpu_custom_call.1} parent=1 // loop_exit
      _
    %v603 = vld [vmem:[#allocation2] sm:$0xf]
    %v604 = vld [vmem:[%s2] sm:$0xff]
    %v605 = vld [vmem:[%s2 + $0x8] sm:$0xff]
    %v606 = vld [vmem:[%s2 + $0x10] sm:$0xff]
    %v607 = vld [vmem:[%s2 + $0x18] sm:$0xff]
    %v608 = vld [vmem:[%s2 + $0x20] sm:$0xff]
    %v609 = vld [vmem:[%s2 + $0x28] sm:$0xff]
    %v610 = vld [vmem:[%s2 + $0x30] sm:$0xff]
    %v611 = vld [vmem:[%s2 + $0x38] sm:$0xff]
    %v612 = vld [vmem:[%s2 + $0x40] sm:$0xff]
    %v613 = vld [vmem:[%s2 + $0x48] sm:$0xff]
    %v614 = vld [vmem:[%s2 + $0x50] sm:$0xff]
    %v615 = vld [vmem:[%s2 + $0x58] sm:$0xff]
    %v616 = vld [vmem:[%s2 + $0x60] sm:$0xff]
    %v617 = vld [vmem:[%s2 + $0x68] sm:$0xff]
    %v618 = vld [vmem:[%s2 + $0x70] sm:$0xff]
    %v619 = vld [vmem:[%s2 + $0x78] sm:$0xff]
    %v620 = vld [vmem:[%s2 + $0x80] sm:$0xff]
    %v621 = vld [vmem:[%s2 + $0x88] sm:$0xff]
    %v622 = vld [vmem:[%s2 + $0x90] sm:$0xff]
    %v623 = vld [vmem:[%s2 + $0x98] sm:$0xff]
    %v624 = vld [vmem:[%s2 + $0xa0] sm:$0xff]
    %v625 = vld [vmem:[%s2 + $0xa8] sm:$0xff]
    %v626 = vld [vmem:[%s2 + $0xb0] sm:$0xff]
    %v627 = vld [vmem:[%s2 + $0xb8] sm:$0xff]
    %v628 = vld [vmem:[%s2 + $0xc0] sm:$0xff]
    %v629 = vld [vmem:[%s2 + $0xc8] sm:$0xff]
    %v630 = vld [vmem:[%s2 + $0xd0] sm:$0xff]
    %v631 = vld [vmem:[%s2 + $0xd8] sm:$0xff]
    %v632 = vld [vmem:[%s3] sm:$0x1]
    %v634 = vperm.slane %v632, 0
    %637 = vst [vmem:[#allocation1] ss:$4 sm:$0xff] %v603
    %v638 = vld.sshfl [vmem:[#allocation1] sm:$0xff pattern:$0x73625140]
    %v639 = vld.sshfl [vmem:[#allocation1 + $0x8] sm:$0xff pattern:$0x73625140]
    %vm641 = vcmask 785408
    %v642 = vsel %vm641, %v639, 0
    %644 = vmatpush.msra.mxu0 %v619
    %645 = vmatpush.msra.mxu0 %v618
    %646 = vmatpush.msra.mxu0 %v617
    %647 = vmatpush.msra.mxu0 %v616
    %648 = vmatpush.msra.mxu0 %v615
    %649 = vmatpush.msra.mxu0 %v614
    %650 = vmatpush.msra.mxu0 %v613
    %651 = vmatpush.msra.mxu0 %v612
    %652 = vmatpush.msra.mxu0 %v611
    %653 = vmatpush.msra.mxu0 %v610
    %654 = vmatpush.msra.mxu0 %v609
    %655 = vmatpush.msra.mxu0 %v608
    %656 = vmatpush.msra.mxu0 %v607
    %657 = vmatpush.msra.mxu0 %v606
    %658 = vmatpush.msra.mxu0 %v605
    %659 = vmatpush.msra.mxu0 %v604
    %660 = vmatmul.f32.gmra.mxu0 %v638
    %v661 = vpop.f32.mrf.mxu0
    %v662 = vadd.f32 %v634, %v661
    %663 = vdwg.mxu0
    %664 = vmatpush.msra.mxu0 0.0
    %665 = vmatpush.msra.mxu0 0.0
    %666 = vmatpush.msra.mxu0 0.0
    %667 = vmatpush.msra.mxu0 0.0
    %668 = vmatpush.msra.mxu0 %v631
    %669 = vmatpush.msra.mxu0 %v630
    %670 = vmatpush.msra.mxu0 %v629
    %671 = vmatpush.msra.mxu0 %v628
    %672 = vmatpush.msra.mxu0 %v627
    %673 = vmatpush.msra.mxu0 %v626
    %674 = vmatpush.msra.mxu0 %v625
    %675 = vmatpush.msra.mxu0 %v624
    %676 = vmatpush.msra.mxu0 %v623
    %677 = vmatpush.msra.mxu0 %v622
    %678 = vmatpush.msra.mxu0 %v621
    %679 = vmatpush.msra.mxu0 %v620
    %680 = vmatmul.f32.gmra.mxu0 %v642
    %v681 = vpop.f32.mrf.mxu0
    %v682 = vadd.f32 %v662, %v681
    %683 = vdwg.mxu0
    %v684 = vmax.f32 %v682, 0.0
    %v685 = vld [vmem:[%s4] sm:$0xff]
    %v686 = vld [vmem:[%s4 + $0x8] sm:$0xff]
    %v687 = vld [vmem:[%s4 + $0x10] sm:$0xff]
    %v688 = vld [vmem:[%s4 + $0x18] sm:$0xff]
    %v689 = vld [vmem:[%s5] sm:$0x1]
    %v691 = vperm.slane %v689, 0
    %vm693 = vcmask 261120
    %v695 = vsel %vm693, %v684, 0
    %697 = vmatpush.msra.mxu0 0.0
    %698 = vmatpush.msra.mxu0 0.0
    %699 = vmatpush.msra.mxu0 0.0
    %700 = vmatpush.msra.mxu0 0.0
    %701 = vmatpush.msra.mxu0 0.0
    %702 = vmatpush.msra.mxu0 0.0
    %703 = vmatpush.msra.mxu0 0.0
    %704 = vmatpush.msra.mxu0 0.0
    %705 = vmatpush.msra.mxu0 0.0
    %706 = vmatpush.msra.mxu0 0.0
    %707 = vmatpush.msra.mxu0 0.0
    %708 = vmatpush.msra.mxu0 0.0
    %709 = vmatpush.msra.mxu0 %v688
    %710 = vmatpush.msra.mxu0 %v687
    %711 = vmatpush.msra.mxu0 %v686
    %712 = vmatpush.msra.mxu0 %v685
    %713 = vmatmul.f32.gmra.mxu0 %v695
    %v714 = vpop.f32.mrf.mxu0
    %v715 = vadd.f32 %v691, %v714
    %716 = vdwg.mxu0
    %717 = vst [vmem:[#allocation3] sm:$0x3] %v715
    // Predicated region
    $region33: #{tpu_custom_call.1} parent=1 // pred_check
      _
    $region34: #{tpu_custom_call.1} parent=1 // pred_check_branch
      %719 = sbr.rel (0) target = $region36
    $region35: #{tpu_custom_call.1} parent=1 // pred_region
      %721 = vsyncadd [#allocation4], 0
      %s723 = sshll.u32 [#allocation3], 4
      %s724 = int_to_ptr.vmem [resolvable:$true] %s723
      %s725 = sshll.u32 %s6, 4
      %s726 = int_to_ptr.hbm [resolvable:$true] %s725
      %728 = dma.vmem_to_hbm [thread:$0]  %s724, 32, %s726, [#allocation4]
    $region36: #{tpu_custom_call.1} parent=1 // pred_fallthru
      _
    // Predicated region
    $region37: #{tpu_custom_call.1} parent=1 // pred_check
      _
    $region38: #{tpu_custom_call.1} parent=1 // pred_check_branch
      %730 = sbr.rel (0) target = $region40
    $region39: #{tpu_custom_call.1} parent=1 // pred_region
      %732 = dma.done [#allocation4], 32
    $region40: #{tpu_custom_call.1} parent=1 // pred_fallthru
      _
    %733 = vsyncpa [#allocation4], 1

</llo_original>
